<compile_context>
chip_gen: v6e
topology: v6e:2x2x1
jax: 0.10.0
libtpu: 0.0.40
codegen_flags: <defaults>
</compile_context>

<pallas_src>
import jax
import jax.numpy as jnp
from jax.experimental import pallas as pl
from jax.experimental.pallas import tpu as pltpu

_LANE = 128


def _round_up(a, b):
    return ((a + b - 1) // b) * b


def _make_mcam_kernel(inv_l, n_lane_chunks):
    """inv_l: 1/true_L (python float); n_lane_chunks: TL // 128 (static)."""

    def kernel(x_ref, o_ref, acc_ref):
        # x_ref: (TM, TL) input block; o_ref: (TM, 1); acc_ref: (TM, 128) f32.
        @pl.when(pl.program_id(1) == 0)
        def _init():
            acc_ref[...] = jnp.zeros_like(acc_ref)

        # Stage 1: fold TL lanes down to 128 lanes with VPU adds on
        # 128-aligned (vreg-aligned) static slices; accumulate in f32.
        for k in range(n_lane_chunks):
            acc_ref[...] += x_ref[:, k * _LANE:(k + 1) * _LANE].astype(jnp.float32)

        @pl.when(pl.program_id(1) == pl.num_programs(1) - 1)
        def _finalize():
            # Stage 2: one cross-lane (XLU) reduce per output tile, scale by 1/L.
            row_sum = jnp.sum(acc_ref[...], axis=-1, keepdims=True)
            o_ref[...] = (row_sum * inv_l).astype(o_ref.dtype)

    return kernel


def mcam_forward(x, *, force_pallas=False):
    """AdaptiveAvgPool1d(1) + squeeze(-1): (N, C, L) -> (N, C) mean over L."""
    n, c, l = x.shape
    itemsize = jnp.dtype(x.dtype).itemsize

    # Tiny inputs: pallas_call launch + per-step overhead dwarfs the work.
    if not force_pallas and x.size * itemsize < 256 * 1024:
        return jnp.mean(x, axis=-1)

    r = n * c
    x2 = x.reshape(r, l)

    # --- L tiling: single step for modest L, otherwise 2048-wide chunks ---
    if l <= 2048:
        tl = _round_up(l, _LANE)
    else:
        tl = 2048
    l_pad = _round_up(l, tl)

    # --- row tiling: keep each (double-buffered) input block <= ~4 MiB,
    # safe on v7x's 64 MiB VMEM and well under v5e/v6e scoped limits ---
    sub_mult = 8 * (4 // itemsize)  # min sublane tile: f32 -> 8, bf16 -> 16
    per_buf_budget = 4 * 1024 * 1024
    tm = per_buf_budget // (tl * itemsize)
    tm = max(sub_mult, (tm // sub_mult) * sub_mult)
    tm = min(tm, 1024)
    tm = min(tm, max(sub_mult, _round_up(r, sub_mult)))
    r_pad = _round_up(r, tm)

    # Zero-pad: padded L columns are zeros (harmless for the sum, we divide by
    # the true L); padded rows are sliced off afterwards.
    if (r_pad, l_pad) != (r, l):
        x2 = jnp.pad(x2, ((0, r_pad - r), (0, l_pad - l)))

    grid = (r_pad // tm, l_pad // tl)
    kernel = _make_mcam_kernel(inv_l=float(1.0 / l), n_lane_chunks=tl // _LANE)

    # TODO(synk): output is (R, 1) (masked stores); a lane-dense (blocks, TM)
    # layout would remove vst.msk but needs an in-kernel sublane->lane relayout.
    out = pl.pallas_call(
        kernel,
        out_shape=jax.ShapeDtypeStruct((r_pad, 1), x.dtype),
        grid_spec=pltpu.PrefetchScalarGridSpec(
            num_scalar_prefetch=0,
            grid=grid,
            in_specs=[pl.BlockSpec((tm, tl), lambda i, j: (i, j))],
            out_specs=pl.BlockSpec((tm, 1), lambda i, j: (i, 0)),
            scratch_shapes=[pltpu.VMEM((tm, _LANE), jnp.float32)],
        ),
        compiler_params=pltpu.CompilerParams(
            dimension_semantics=("parallel", "arbitrary"),
            vmem_limit_bytes=32 * 1024 * 1024,
        ),
    )(x2)

    return out[:r, 0].reshape(n, c)


if __name__ == "__main__":
    key = jax.random.PRNGKey(0)

    # Small demo shape consistent with the (batch, channels, length) 1-D input.
    N, C, L = 2, 4, 16
    x = jax.random.normal(key, (N, C, L), dtype=jnp.float32)

    # Exercise the Pallas kernel explicitly (the auto path would bypass it for
    # an input this tiny).
    out = jax.block_until_ready(mcam_forward(x, force_pallas=True))
    ref = jnp.mean(x, axis=-1)
    assert out.shape == (N, C)
    assert jnp.allclose(out, ref, atol=1e-5, rtol=1e-5)

    # Auto path (tiny-input bypass) must match too.
    out_auto = jax.block_until_ready(mcam_forward(x))
    assert jnp.allclose(out_auto, ref, atol=1e-6, rtol=1e-6)

    # Larger shape exercising row padding and multi-step L accumulation.
    N2, C2, L2 = 4, 99, 5000
    x2 = jax.random.normal(jax.random.PRNGKey(1), (N2, C2, L2), dtype=jnp.float32)
    out2 = jax.block_until_ready(mcam_forward(x2, force_pallas=True))
    ref2 = jnp.mean(x2, axis=-1)
    assert out2.shape == (N2, C2)
    assert jnp.allclose(out2, ref2, atol=1e-5, rtol=1e-5)

    print("KERNEL_OK")
</pallas_src>

<mosaic_0001>
module attributes {stable_mosaic.version = 11 : i64} {
  func.func @kernel(%arg0: i32, %arg1: i32, %arg2: memref<8x128xf32, #tpu.memory_space<vmem>>, %arg3: memref<8x1xf32, #tpu.memory_space<vmem>>, %arg4: memref<8x128xf32, #tpu.memory_space<vmem>>) attributes {dimension_semantics = [#tpu.dimension_semantics<parallel>, #tpu.dimension_semantics<arbitrary>], iteration_bounds = array<i64: 1, 1>, scalar_prefetch = 0 : i64, scratch_operands = 1 : i64, tpu.core_type = #tpu.core_type<tc>, window_params = [{transform_indices = @transform_0, window_bounds = array<i64: 8, 128>}, {transform_indices = @transform_1, window_bounds = array<i64: 8, 1>}]} {
    %c0_i32 = arith.constant 0 : i32
    %0 = arith.cmpi eq, %arg1, %c0_i32 : i32
    %1 = arith.extui %0 : i1 to i32
    %c0_i32_0 = arith.constant 0 : i32
    %2 = arith.cmpi ne, %1, %c0_i32_0 : i32
    scf.if %2 {
      %cst = arith.constant 0.000000e+00 : f32
      %10 = vector.broadcast %cst : f32 to vector<8x128xf32>
      %c0_8 = arith.constant 0 : index
      %c0_9 = arith.constant 0 : index
      %11 = vector.load %arg4[%c0_8, %c0_9] : memref<8x128xf32, #tpu.memory_space<vmem>>, vector<8x128xf32>
      tpu.vector_store %arg4[%c0_8, %c0_9], %10 {strides = array<i32>} : memref<8x128xf32, #tpu.memory_space<vmem>>, vector<8x128xf32>,
    } else {
    }
    %c0 = arith.constant 0 : index
    %c0_1 = arith.constant 0 : index
    %3 = vector.load %arg4[%c0, %c0_1] : memref<8x128xf32, #tpu.memory_space<vmem>>, vector<8x128xf32>
    %c0_2 = arith.constant 0 : index
    %c0_3 = arith.constant 0 : index
    %4 = vector.load %arg2[%c0_2, %c0_3] : memref<8x128xf32, #tpu.memory_space<vmem>>, vector<8x128xf32>
    %5 = arith.addf %3, %4 : vector<8x128xf32>
    %c0_4 = arith.constant 0 : index
    %c0_5 = arith.constant 0 : index
    %6 = vector.load %arg4[%c0_4, %c0_5] : memref<8x128xf32, #tpu.memory_space<vmem>>, vector<8x128xf32>
    tpu.vector_store %arg4[%c0_4, %c0_5], %5 {strides = array<i32>} : memref<8x128xf32, #tpu.memory_space<vmem>>, vector<8x128xf32>,
    %c0_i32_6 = arith.constant 0 : i32
    %7 = arith.cmpi eq, %arg1, %c0_i32_6 : i32
    %8 = arith.extui %7 : i1 to i32
    %c0_i32_7 = arith.constant 0 : i32
    %9 = arith.cmpi ne, %8, %c0_i32_7 : i32
    scf.if %9 {
      %c0_8 = arith.constant 0 : index
      %c0_9 = arith.constant 0 : index
      %10 = vector.load %arg4[%c0_8, %c0_9] : memref<8x128xf32, #tpu.memory_space<vmem>>, vector<8x128xf32>
      %cst = arith.constant dense<0.000000e+00> : vector<8xf32>
      %11 = vector.multi_reduction <add>, %10, %cst [1] : vector<8x128xf32> to vector<8xf32>
      %12 = vector.shape_cast %11 : vector<8xf32> to vector<8x1xf32>
      %cst_10 = arith.constant 6.250000e-02 : f32
      %13 = vector.broadcast %cst_10 : f32 to vector<8x1xf32>
      %14 = arith.mulf %12, %13 : vector<8x1xf32>
      %c0_11 = arith.constant 0 : index
      %c0_12 = arith.constant 0 : index
      %15 = vector.load %arg3[%c0_11, %c0_12] : memref<8x1xf32, #tpu.memory_space<vmem>>, vector<8x1xf32>
      tpu.vector_store %arg3[%c0_11, %c0_12], %14 {strides = array<i32>} : memref<8x1xf32, #tpu.memory_space<vmem>>, vector<8x1xf32>,
    } else {
    }
    return
  }
  func.func @transform_0(%arg0: i32, %arg1: i32) -> (i32, i32) {
    %c0_i32 = arith.constant 0 : i32
    return %arg0, %arg1 : i32, i32
  }
  func.func @transform_1(%arg0: i32, %arg1: i32) -> (i32, i32) {
    %c0_i32 = arith.constant 0 : i32
    %c0_i32_0 = arith.constant 0 : i32
    return %arg0, %c0_i32 : i32, i32
  }
}

</mosaic_0001>

<llo_original>
// kernel: tpu_custom_call.1
$region0: #{tpu_custom_call.1}
  #allocation0 [shape = 'u32[]', space=smem, size = 0x4, offset = 0x4, fixed_abs, tag = 'smem constant byte address 0x4 - core index']
  #allocation1 [shape = 'u32[144,128]{1,0:T(1,128)}', space=vmem, size = 0x12000, scoped, tag = 'internal scratch']
  #allocation2 [shape = 'f32[8,128]{1,0:T(8,128)}', space=vmem, size = 0x1000, scoped, tag = 'scratch operand']
  %s0 = inlined_call_operand.hbm [shape: f32[8,128], index: 0, kind: input, shape index: {}]
  %s1 = inlined_call_operand.vmem [shape: f32[8,1], index: 1, kind: output, shape index: {}]
  %s2 = sld [smem:[#allocation0]]
  $region26: #{tpu_custom_call.1} parent=0
    _
  %s4 = ssub.s32 1, %s2
  %s5 = scalar_select 0, %s4, %s2
  $region1: #{tpu_custom_call.1} parent=0
    #allocation3 [shape = 'u8[4096]{0}', space=vmem, size = 0x1000, scoped, tag = 'input window, operand 0, single buffered']
    #allocation4 [shape = 's32[1]{0}', space=sflag, size = 0x4, scoped, tag = 'scoped memory for tpu_custom_call.1']
    %6 = vsyncpa [#allocation4], 0
    // Predicated region
    $region2: #{tpu_custom_call.1} parent=1 // pred_check
      _
    $region3: #{tpu_custom_call.1} parent=1 // pred_check_branch
      %8 = sbr.rel (0) target = $region5
    $region4: #{tpu_custom_call.1} parent=1 // pred_region
      %s10 = ssub.s32 128, 128
      %11 = vsyncadd [#allocation4], %s10
      %s13 = sshll.u32 [#allocation3], 4
      %s14 = int_to_ptr.vmem [resolvable:$true] %s13
      %16 = dma.hbm_to_vmem [thread:$0]  %s0, 128, %s14, [#allocation4]
    $region5: #{tpu_custom_call.1} parent=1 // pred_fallthru
      _
    // Predicated region
    $region6: #{tpu_custom_call.1} parent=1 // pred_check
      _
    $region7: #{tpu_custom_call.1} parent=1 // pred_check_branch
      %18 = sbr.rel (0) target = $region9
    $region8: #{tpu_custom_call.1} parent=1 // pred_region
      %19 = dma.done [#allocation4], 128
    $region9: #{tpu_custom_call.1} parent=1 // pred_fallthru
      _
    %p20 = scmp.eq.s32.totalorder 0, 0
    // Predicated region
    $region10: #{tpu_custom_call.1} parent=1 // pred_check
      %p21 = pneg %p20
    $region11: #{tpu_custom_call.1} parent=1 // pred_check_branch
      %23 = sbr.rel (%p21) target = $region13
    $region12: #{tpu_custom_call.1} parent=1 // pred_region
      %24 = vst [vmem:[#allocation2] sm:$0xff] 0.0
    $region13: #{tpu_custom_call.1} parent=1 // pred_fallthru
      _
    %v25 = vld [vmem:[#allocation2] sm:$0xff]
    %v26 = vld [vmem:[#allocation3] sm:$0xff]
    %v27 = vadd.f32 %v25, %v26
    %28 = vst [vmem:[#allocation2] sm:$0xff] %v27
    // Predicated region
    $region14: #{tpu_custom_call.1} parent=1 // pred_check
      %p29 = pneg %p20
    $region15: #{tpu_custom_call.1} parent=1 // pred_check_branch
      %31 = sbr.rel (%p29) target = $region17
    $region16: #{tpu_custom_call.1} parent=1 // pred_region
      %v32 = vld [vmem:[#allocation2] sm:$0xff]
      %33 = vadd.xlane.f32.xlu0 %v32
      %v34 = vpop.xlane.xlu0 %33
      %v35 = vmul.f32 %v34, 0.0625
      %vm36 = vcmask 7168
      %37 = vst.msk [vmem:[%s1] sm:$0xff] %vm36, %v35
    $region17: #{tpu_custom_call.1} parent=1 // pred_fallthru
      _
    // Predicated region
    $region18: #{tpu_custom_call.1} parent=1 // pred_check
      _
    $region19: #{tpu_custom_call.1} parent=1 // pred_check_branch
      %39 = sbr.rel (0) target = $region21
    $region20: #{tpu_custom_call.1} parent=1 // pred_region
      _
    $region21: #{tpu_custom_call.1} parent=1 // pred_fallthru
      _
    // Predicated region
    $region22: #{tpu_custom_call.1} parent=1 // pred_check
      _
    $region23: #{tpu_custom_call.1} parent=1 // pred_check_branch
      %41 = sbr.rel (0) target = $region25
    $region24: #{tpu_custom_call.1} parent=1 // pred_region
      _
    $region25: #{tpu_custom_call.1} parent=1 // pred_fallthru
      _
    %42 = vsyncpa [#allocation4], 1

</llo_original>
